<compile_context>
chip_gen: v6e
topology: v6e:2x2x1
jax: 0.10.0
libtpu: 0.0.40
codegen_flags: <defaults>
</compile_context>

<pallas_src>
import functools

import jax
import jax.numpy as jnp
from jax.experimental import pallas as pl
from jax.experimental.pallas import tpu as pltpu


_LANE = 128
_TARGET_BLOCK_BYTES = 6 * 1024 * 1024     # ~85%+ of HBM roofline per step
_MAX_BUFFERED_BYTES = 24 * 1024 * 1024    # safe on v7x (64 MiB physical VMEM)


def _dtype_min(dtype):
    dtype = jnp.dtype(dtype)
    if jnp.issubdtype(dtype, jnp.floating):
        return float("-inf")
    if jnp.issubdtype(dtype, jnp.integer):
        return int(jnp.iinfo(dtype).min)
    if dtype == jnp.bool_:
        return False
    raise TypeError(f"global_max_pooling: unsupported dtype {dtype}")


def _gmp_kernel(x_ref, o_ref, *, hw, hw_tile, fill):
    """x_ref: (TR, THW) lane-dense tile; o_ref: (1, TR) running max over the hw axis."""
    k = pl.program_id(1)

    @pl.when(k == 0)
    def _init():
        # The output block is revisited across the (arbitrary) hw axis, so it acts
        # as the accumulator; seed it with the dtype's own minimum (not float -inf
        # for integer dtypes).
        o_ref[...] = jnp.full(o_ref.shape, fill, o_ref.dtype)

    x = x_ref[...]
    if hw % hw_tile:
        # Ragged last hw chunk: out-of-bounds lanes hold unspecified pad values,
        # so mask them to dtype-min so they can never win the max.
        lane = jax.lax.broadcasted_iota(jnp.int32, x.shape, 1)
        x = jnp.where(k * hw_tile + lane < hw, x, fill)

    tile_max = jnp.max(x, axis=-1)                      # VPU + XLU, hidden under DMA
    o_ref[...] = jnp.maximum(o_ref[...], tile_max[None, :])


def _choose_tiles(rows, hw, itemsize, target_bytes=_TARGET_BLOCK_BYTES):
    """Pick (row_tile, hw_tile). Row tiles are the full extent or a multiple of 128
    (sublane-aligned for f32/bf16/int8 and lane-dense on writeback); hw tiles are the
    full extent or a multiple of 128 (dense lanes)."""
    total = rows * hw * itemsize

    if total <= target_bytes:
        tr, thw = rows, hw
    else:
        unit_r = rows if rows <= _LANE else _LANE        # smallest legal row tile
        if unit_r * hw * itemsize <= target_bytes:
            # Keep the whole H*W reduce in one pass; tile only the row axis.
            thw = hw
            tr = target_bytes // (hw * itemsize)
            tr = rows if tr >= rows else (tr // _LANE) * _LANE
        else:
            # Even `unit_r` rows at full H*W blow the budget: also chunk H*W
            # (this becomes the trailing "arbitrary" accumulation grid axis).
            tr = unit_r
            thw = (target_bytes // (tr * itemsize)) // _LANE * _LANE
            thw = min(max(thw, _LANE), hw)

    # Feed both v7x TensorCores: if the (parallel) row axis would have a single
    # block and the problem is big enough that per-step overhead is noise,
    # split it into two 128-aligned blocks.
    if tr == rows and rows >= 2 * _LANE and total >= 2 * 1024 * 1024:
        tr = (((rows + 1) // 2) + _LANE - 1) // _LANE * _LANE

    return tr, thw


def global_max_pooling(x: jax.Array) -> jax.Array:
    """Equivalent of GlobalMaxPooling.forward: max over the last two dims, keepdim=True."""
    if x.ndim < 2:
        raise ValueError("global_max_pooling expects at least 2 dims")
    *lead, h, w = x.shape
    hw = h * w
    rows = 1
    for d in lead:
        rows *= d

    itemsize = jnp.dtype(x.dtype).itemsize
    x2 = x.reshape(rows, hw)                 # free view of a contiguous NCHW tensor
    fill = _dtype_min(x.dtype)

    tr, thw = _choose_tiles(rows, hw, itemsize)
    n_row_blocks = pl.cdiv(rows, tr)
    n_hw_blocks = pl.cdiv(hw, thw)

    block_bytes = tr * thw * itemsize
    # Third pipeline buffer only when there is enough work and it fits the v7x-safe cap.
    buffer_count = 3 if (n_row_blocks * n_hw_blocks >= 3
                         and 3 * block_bytes <= _MAX_BUFFERED_BYTES) else 2
    in_spec_kwargs = {}
    if buffer_count != 2 and hasattr(pl, "Buffered"):
        in_spec_kwargs["pipeline_mode"] = pl.Buffered(buffer_count)

    # Declare the scoped VMEM we actually need (input buffers + output + headroom);
    # the scoped default (16 MiB on v5e) is the real constraint, not physical VMEM.
    vmem_limit = min(buffer_count * block_bytes + 2 * tr * itemsize + (8 << 20),
                     32 << 20)

    kernel = functools.partial(_gmp_kernel, hw=hw, hw_tile=thw, fill=fill)

    out2 = pl.pallas_call(
        kernel,
        out_shape=jax.ShapeDtypeStruct((1, rows), x.dtype),
        grid_spec=pltpu.PrefetchScalarGridSpec(
            num_scalar_prefetch=0,
            grid=(n_row_blocks, n_hw_blocks),            # reduction (hw) axis last
            in_specs=[
                pl.BlockSpec((tr, thw), lambda r, k: (r, k), **in_spec_kwargs),
            ],
            # Lane-dense (1, TR) output tile, revisited across the hw axis.
            # Partial row tiles rely on Pallas discarding out-of-bounds output
            # lanes on writeback (padded rows' garbage maxima never land).
            out_specs=pl.BlockSpec((1, tr), lambda r, k: (0, r)),
        ),
        compiler_params=pltpu.CompilerParams(
            dimension_semantics=("parallel", "arbitrary"),
            vmem_limit_bytes=int(vmem_limit),
        ),
        cost_estimate=pl.CostEstimate(
            flops=rows * hw,
            transcendentals=0,
            bytes_accessed=rows * hw * itemsize + rows * itemsize,
        ),
    )(x2)

    # Restore the keepdim=True spatial dims outside the kernel (layout plumbing only).
    return out2.reshape(*lead, 1, 1)


if __name__ == "__main__":
    key = jax.random.PRNGKey(0)
    x = jax.random.normal(key, (2, 4, 16, 16), dtype=jnp.float32)

    out = global_max_pooling(x)
    jax.block_until_ready(out)

    # Sanity check against plain-JAX reference of the PyTorch semantics.
    ref = jnp.max(jnp.max(x, axis=-1, keepdims=True), axis=-2, keepdims=True)
    assert out.shape == (2, 4, 1, 1), out.shape
    assert out.dtype == x.dtype
    assert jnp.allclose(out, ref), "mismatch vs reference"

    print("KERNEL_OK")
</pallas_src>

<mosaic_0001>
module attributes {stable_mosaic.version = 11 : i64} {
  func.func @_gmp_kernel(%arg0: i32, %arg1: i32, %arg2: memref<8x256xf32, #tpu.memory_space<vmem>>, %arg3: memref<1x8xf32, #tpu.memory_space<vmem>>) attributes {dimension_semantics = [#tpu.dimension_semantics<parallel>, #tpu.dimension_semantics<arbitrary>], iteration_bounds = array<i64: 1, 1>, scalar_prefetch = 0 : i64, scratch_operands = 0 : i64, tpu.core_type = #tpu.core_type<tc>, window_params = [{transform_indices = @transform_0, window_bounds = array<i64: 8, 256>}, {transform_indices = @transform_1, window_bounds = array<i64: 1, 8>}]} {
    %c0_i32 = arith.constant 0 : i32
    %0 = arith.cmpi eq, %arg1, %c0_i32 : i32
    %1 = arith.extui %0 : i1 to i32
    %c0_i32_0 = arith.constant 0 : i32
    %2 = arith.cmpi ne, %1, %c0_i32_0 : i32
    scf.if %2 {
      %cst_6 = arith.constant 0xFF800000 : f32
      %9 = vector.broadcast %cst_6 : f32 to vector<1x8xf32>
      %c0_7 = arith.constant 0 : index
      %c0_8 = arith.constant 0 : index
      %10 = vector.load %arg3[%c0_7, %c0_8] : memref<1x8xf32, #tpu.memory_space<vmem>>, vector<1x8xf32>
      tpu.vector_store %arg3[%c0_7, %c0_8], %9 {strides = array<i32>} : memref<1x8xf32, #tpu.memory_space<vmem>>, vector<1x8xf32>,
    } else {
    }
    %c0 = arith.constant 0 : index
    %c0_1 = arith.constant 0 : index
    %3 = vector.load %arg2[%c0, %c0_1] : memref<8x256xf32, #tpu.memory_space<vmem>>, vector<8x256xf32>
    %cst = arith.constant dense<0xFF800000> : vector<8xf32>
    %4 = vector.multi_reduction <maximumf>, %3, %cst [1] : vector<8x256xf32> to vector<8xf32>
    %c0_2 = arith.constant 0 : index
    %c0_3 = arith.constant 0 : index
    %5 = vector.load %arg3[%c0_2, %c0_3] : memref<1x8xf32, #tpu.memory_space<vmem>>, vector<1x8xf32>
    %6 = vector.shape_cast %4 : vector<8xf32> to vector<1x8xf32>
    %7 = arith.maximumf %5, %6 : vector<1x8xf32>
    %c0_4 = arith.constant 0 : index
    %c0_5 = arith.constant 0 : index
    %8 = vector.load %arg3[%c0_4, %c0_5] : memref<1x8xf32, #tpu.memory_space<vmem>>, vector<1x8xf32>
    tpu.vector_store %arg3[%c0_4, %c0_5], %7 {strides = array<i32>} : memref<1x8xf32, #tpu.memory_space<vmem>>, vector<1x8xf32>,
    return
  }
  func.func @transform_0(%arg0: i32, %arg1: i32) -> (i32, i32) {
    %c0_i32 = arith.constant 0 : i32
    return %arg0, %arg1 : i32, i32
  }
  func.func @transform_1(%arg0: i32, %arg1: i32) -> (i32, i32) {
    %c0_i32 = arith.constant 0 : i32
    %c0_i32_0 = arith.constant 0 : i32
    return %c0_i32, %arg0 : i32, i32
  }
}

</mosaic_0001>

<llo_original>
// kernel: tpu_custom_call.1
$region0: #{tpu_custom_call.1}
  #allocation0 [shape = 'u32[]', space=smem, size = 0x4, offset = 0x4, fixed_abs, tag = 'smem constant byte address 0x4 - core index']
  #allocation1 [shape = 'u32[144,128]{1,0:T(1,128)}', space=vmem, size = 0x12000, scoped, tag = 'internal scratch']
  %s0 = inlined_call_operand.hbm [shape: f32[8,256], index: 0, kind: input, shape index: {}]
  %s1 = inlined_call_operand.hbm [shape: f32[1,8], index: 1, kind: output, shape index: {}]
  %s2 = sld [smem:[#allocation0]]
  $region22: #{tpu_custom_call.1} parent=0
    _
  %s4 = ssub.s32 1, %s2
  %s5 = scalar_select 0, %s4, %s2
  $region1: #{tpu_custom_call.1} parent=0
    #allocation2 [shape = 'u8[8192]{0}', space=vmem, size = 0x2000, scoped, tag = 'input window, operand 0, single buffered']
    #allocation3 [shape = 's32[1]{0}', space=sflag, size = 0x4, scoped, tag = 'scoped memory for tpu_custom_call.1']
    #allocation4 [shape = 's32[1]{0}', space=sflag, size = 0x4, scoped, tag = 'scoped memory for tpu_custom_call.1']
    #allocation5 [shape = 'u8[512]{0}', space=vmem, size = 0x400, scoped, tag = 'output window, operand 0, single buffered']
    %6 = vsyncpa [#allocation3], 0
    %7 = vsyncpa [#allocation4], 0
    // Predicated region
    $region2: #{tpu_custom_call.1} parent=1 // pred_check
      _
    $region3: #{tpu_custom_call.1} parent=1 // pred_check_branch
      %9 = sbr.rel (0) target = $region5
    $region4: #{tpu_custom_call.1} parent=1 // pred_region
      %s11 = ssub.s32 256, 256
      %12 = vsyncadd [#allocation3], %s11
      %s14 = sshll.u32 [#allocation2], 4
      %s15 = int_to_ptr.vmem [resolvable:$true] %s14
      %17 = dma.hbm_to_vmem [thread:$0]  %s0, 256, %s15, [#allocation3]
    $region5: #{tpu_custom_call.1} parent=1 // pred_fallthru
      _
    // Predicated region
    $region6: #{tpu_custom_call.1} parent=1 // pred_check
      _
    $region7: #{tpu_custom_call.1} parent=1 // pred_check_branch
      %19 = sbr.rel (0) target = $region9
    $region8: #{tpu_custom_call.1} parent=1 // pred_region
      %20 = dma.done [#allocation3], 256
    $region9: #{tpu_custom_call.1} parent=1 // pred_fallthru
      _
    %p21 = scmp.eq.s32.totalorder 0, 0
    // Predicated region
    $region10: #{tpu_custom_call.1} parent=1 // pred_check
      %p22 = pneg %p21
    $region11: #{tpu_custom_call.1} parent=1 // pred_check_branch
      %24 = sbr.rel (%p22) target = $region13
    $region12: #{tpu_custom_call.1} parent=1 // pred_region
      %vm25 = vcmask 57344
      %26 = vst.msk [vmem:[#allocation5] sm:$0x1] %vm25, -inf
    $region13: #{tpu_custom_call.1} parent=1 // pred_fallthru
      _
    %v27 = vld [vmem:[#allocation2] sm:$0xff]
    %v28 = vld [vmem:[#allocation2 + $0x8] sm:$0xff]
    %v29 = vmax.f32 %v27, %v28
    %30 = vmax.xlane.f32.xlu0 %v29
    %v31 = vpop.xlane.xlu0 %30
    %v32 = vld [vmem:[#allocation5] sm:$0x1]
    %v34 = vlaneseq
    %v35 = vshrl.u32 %v34, 7
    %v36 = vsub.s32 0, %v35
    %v37 = vrot.slane %v31, %v36
    %v38 = vlaneseq
    %v39 = vshrl.u32 %v38, 7
    %v40 = vsub.s32 1, %v39
    %v41 = vrot.slane %v31, %v40
    %v42 = vlaneseq
    %v43 = vshrl.u32 %v42, 7
    %v44 = vsub.s32 2, %v43
    %v45 = vrot.slane %v31, %v44
    %v46 = vlaneseq
    %v47 = vshrl.u32 %v46, 7
    %v48 = vsub.s32 3, %v47
    %v49 = vrot.slane %v31, %v48
    %v50 = vlaneseq
    %v51 = vshrl.u32 %v50, 7
    %v52 = vsub.s32 4, %v51
    %v53 = vrot.slane %v31, %v52
    %v54 = vlaneseq
    %v55 = vshrl.u32 %v54, 7
    %v56 = vsub.s32 5, %v55
    %v57 = vrot.slane %v31, %v56
    %v58 = vlaneseq
    %v59 = vshrl.u32 %v58, 7
    %v60 = vsub.s32 6, %v59
    %v61 = vrot.slane %v31, %v60
    %v62 = vlaneseq
    %v63 = vshrl.u32 %v62, 7
    %v64 = vsub.s32 7, %v63
    %v65 = vrot.slane %v31, %v64
    %v66 = vcombine.low %v37, %v41
    %v67 = vcombine.low %v45, %v49
    %v68 = vcombine.low %v53, %v57
    %v69 = vcombine.low %v61, %v65
    %v71 = vunpack.c.l.s4 1966171168
    %v72 = vunpack.c.0.s8 %v71
    %v73 = vlaneseq
    %v74 = vshrl.u32 %v73, 7
    %v75 = vsub.s32 %v72, %v74
    %v76 = vrot.slane %v66, %v75
    %v78 = vunpack.c.l.s4 1966171168
    %v79 = vunpack.c.0.s8 %v78
    %v80 = vlaneseq
    %v81 = vshrl.u32 %v80, 7
    %v82 = vsub.s32 %v79, %v81
    %v83 = vrot.slane %v67, %v82
    %v85 = vunpack.c.l.s4 1966171168
    %v86 = vunpack.c.0.s8 %v85
    %v87 = vlaneseq
    %v88 = vshrl.u32 %v87, 7
    %v89 = vsub.s32 %v86, %v88
    %v90 = vrot.slane %v68, %v89
    %v92 = vunpack.c.l.s4 1966171168
    %v93 = vunpack.c.0.s8 %v92
    %v94 = vlaneseq
    %v95 = vshrl.u32 %v94, 7
    %v96 = vsub.s32 %v93, %v95
    %v97 = vrot.slane %v69, %v96
    %v98 = vcombine.low %v76, %v83
    %v99 = vcombine.low %v90, %v97
    %v101 = vunpack.c.l.s4 1966171168
    %v102 = vunpack.c.0.s8 %v101
    %v103 = vlaneseq
    %v104 = vshrl.u32 %v103, 7
    %v105 = vsub.s32 %v102, %v104
    %v106 = vrot.slane %v98, %v105
    %v108 = vunpack.c.l.s4 1966171168
    %v109 = vunpack.c.0.s8 %v108
    %v110 = vlaneseq
    %v111 = vshrl.u32 %v110, 7
    %v112 = vsub.s32 %v109, %v111
    %v113 = vrot.slane %v99, %v112
    %v114 = vcombine.low %v106, %v113
    %115 = vset.pattern.permute.xlu0 0
    %116 = vperm.xlu0 %115, %v114
    %v117 = vpop.permute.xlu0 %116
    %v118 = vlaneseq
    %v119 = vand.u32 %v118, 127
    %v120 = vlaneseq
    %v121 = vshrl.u32 %v120, 7
    %v122 = vsub.s32 %v119, %v121
    %v123 = vrot.slane %v117, %v122
    %v125 = vunpack.c.l.s4 1966171168
    %v126 = vunpack.c.0.s8 %v125
    %v127 = vlaneseq
    %v128 = vshrl.u32 %v127, 7
    %v129 = vsub.s32 %v126, %v128
    %v130 = vrot.slane %v123, %v129
    %v132 = vunpack.c.l.s4 1966171168
    %v133 = vunpack.c.0.s8 %v132
    %v134 = vlaneseq
    %v135 = vshrl.u32 %v134, 7
    %v136 = vsub.s32 %v133, %v135
    %v137 = vrot.slane %v130, %v136
    %v139 = vmax.f32 %v32, %v137
    %vm140 = vcmask 57344
    %141 = vst.msk [vmem:[#allocation5] sm:$0x1] %vm140, %v139
    // Predicated region
    $region14: #{tpu_custom_call.1} parent=1 // pred_check
      _
    $region15: #{tpu_custom_call.1} parent=1 // pred_check_branch
      %143 = sbr.rel (0) target = $region17
    $region16: #{tpu_custom_call.1} parent=1 // pred_region
      %s145 = ssub.s32 16, 16
      %146 = vsyncadd [#allocation4], %s145
      %s148 = sshll.u32 [#allocation5], 4
      %s149 = int_to_ptr.vmem [resolvable:$true] %s148
      %151 = dma.vmem_to_hbm [thread:$0]  %s149, 16, %s1, [#allocation4]
    $region17: #{tpu_custom_call.1} parent=1 // pred_fallthru
      _
    // Predicated region
    $region18: #{tpu_custom_call.1} parent=1 // pred_check
      _
    $region19: #{tpu_custom_call.1} parent=1 // pred_check_branch
      %153 = sbr.rel (0) target = $region21
    $region20: #{tpu_custom_call.1} parent=1 // pred_region
      %154 = dma.done [#allocation4], 16
    $region21: #{tpu_custom_call.1} parent=1 // pred_fallthru
      _
    %155 = vsyncpa [#allocation3], 1
    %156 = vsyncpa [#allocation4], 1

</llo_original>
